<compile_context>
chip_gen: v7x
topology: tpu7x:2x2x1
jax: 0.10.0
libtpu: 0.0.40
codegen_flags: <defaults>
</compile_context>

<pallas_src>
import jax
import jax.numpy as jnp
from jax.experimental import pallas as pl
from jax.experimental.pallas import tpu as pltpu


# ------------------------------- Pallas kernel ------------------------------ #

def fused_net_kernel(p_ref, wbig_ref, bc_ref, w1_ref, b1_ref, w2_ref, b2_ref,
                     out_ref):
    # p_ref:    (4*TB, 900) bf16  im2col patches; rows k*TB..(k+1)*TB-1 are
    #                             pool offset k (k = dy*2+dx)
    # wbig_ref: (900, 180)  bf16  block-diagonal conv weight, columns already
    #                             in torch (C,H,W) flatten order c*36+hw
    # bc_ref:   (1, 180)    f32   conv bias broadcast over spatial positions
    # w1_ref:   (180, 50)   bf16, b1_ref: (1, 50)  f32
    # w2_ref:   (50, 128)   bf16, b2_ref: (1, 128) f32 (pad entries = -1e30)
    # out_ref:  (TB, 128)   f32   log-softmax outputs (first 10 lanes valid)
    tb = out_ref.shape[0]

    # One merged MXU matmul for all 4 pool offsets.
    conv = jnp.dot(p_ref[...], wbig_ref[...],
                   preferred_element_type=jnp.float32)           # (4*TB, 180) f32

    # 2x2 max-pool == running elementwise max over the 4 pool-offset groups.
    pooled = conv[0 * tb:1 * tb, :]
    pooled = jnp.maximum(pooled, conv[1 * tb:2 * tb, :])
    pooled = jnp.maximum(pooled, conv[2 * tb:3 * tb, :])
    pooled = jnp.maximum(pooled, conv[3 * tb:4 * tb, :])
    # Bias after max is exact: max(a+c, b+c) = max(a, b) + c.
    act = jnp.maximum(pooled + bc_ref[...], 0.0)                 # relu, (TB, 180)

    h = jnp.dot(act.astype(jnp.bfloat16), w1_ref[...],
                preferred_element_type=jnp.float32) + b1_ref[...]
    h = jnp.maximum(h, 0.0)                                      # relu(fc1), (TB, 50)

    logits = jnp.dot(h.astype(jnp.bfloat16), w2_ref[...],
                     preferred_element_type=jnp.float32) + b2_ref[...]  # (TB, 128)

    # LogSoftmax over lanes; padded classes carry a -1e30 bias so exp() under-
    # flows to 0 and the normalization over the first 10 lanes is exact.
    m = jnp.max(logits, axis=-1, keepdims=True)
    s = logits - m
    out_ref[...] = s - jnp.log(jnp.sum(jnp.exp(s), axis=-1, keepdims=True))


# ------------------------------ Plain-JAX glue ------------------------------ #

def build_pool_patches(x, b_pad, tb):
    """x: (B, 1, 28, 28) -> (nt*4*tb, 900) bf16 patches, nt = b_pad // tb.

    Row layout:  row = t*(4*tb) + (dy*2+dx)*tb + bi    (bi = local batch index)
    Column:      (ph*6+pw)*25 + (kh*5+kw)
    Value:       x[t*tb+bi, 0, 4*ph + 2*dy + kh, 4*pw + 2*dx + kw]

    Built only from strided slices + stacks in the final order (no transpose
    pass over HBM), in bf16.
    """
    batch = x.shape[0]
    nt = b_pad // tb
    img = x[:, 0].astype(jnp.bfloat16)                           # (B, 28, 28)
    if b_pad != batch:
        img = jnp.pad(img, ((0, b_pad - batch), (0, 0), (0, 0)))
    img = img.reshape(nt, tb, 28, 28)

    groups = []
    for dy in range(2):
        for dx in range(2):
            taps = [img[:, :, 2 * dy + kh: 2 * dy + kh + 21: 4,
                              2 * dx + kw: 2 * dx + kw + 21: 4]  # (nt, tb, 6, 6)
                    for kh in range(5) for kw in range(5)]
            s = jnp.stack(taps, axis=-1)                         # (nt, tb, 6, 6, 25)
            groups.append(s.reshape(nt, tb, 900))
    p = jnp.stack(groups, axis=1)                                # (nt, 4, tb, 900)
    return p.reshape(nt * 4 * tb, 900)


def _pick_batch_tile(batch):
    # Multiple of 8 sublanes; cap at 256 so bf16 blocks fit every generation's
    # default scoped-VMEM; for batch > 8 pick ~half the batch so the grid has
    # >= 2 steps and both v7x TensorCores get work via the "parallel" axis.
    if batch <= 8:
        return 8
    half = (batch + 1) // 2
    return min(256, ((half + 7) // 8) * 8)


def init_params(key):
    """Deterministic init mirroring the torch layer shapes."""
    k1, k2, k3, k4, k5, k6 = jax.random.split(key, 6)

    def u(k, shape, fan_in):
        bound = 1.0 / jnp.sqrt(jnp.float32(fan_in))
        return jax.random.uniform(k, shape, jnp.float32, -bound, bound)

    return {
        "conv_w": u(k1, (5, 1, 5, 5), 25),    # Conv2d(1, 5, k=5, stride=2)
        "conv_b": u(k2, (5,), 25),
        "fc1_w": u(k3, (50, 180), 180),       # Linear(180, 50)
        "fc1_b": u(k4, (50,), 180),
        "fc2_w": u(k5, (10, 50), 50),         # Linear(50, 10)
        "fc2_b": u(k6, (10,), 50),
    }


@jax.jit
def net_forward(x, params):
    batch = x.shape[0]
    tb = _pick_batch_tile(batch)
    b_pad = ((batch + tb - 1) // tb) * tb
    nt = b_pad // tb

    patches = build_pool_patches(x, b_pad, tb)                   # (nt*4*tb, 900) bf16

    # Block-diagonal (900, 180) conv weight, columns already in torch flatten
    # order c*36 + hw:  w_big[hw*25 + e, c*36 + hw] = conv_w[c, 0, kh, kw].
    wc = params["conv_w"].reshape(5, 25)                         # (C, e)
    eye36 = jnp.eye(36, dtype=jnp.float32)
    w_big = jnp.einsum("ce,hk->heck", wc, eye36).reshape(900, 180)
    w_big = w_big.astype(jnp.bfloat16)
    b_conv = jnp.repeat(params["conv_b"], 36).reshape(1, 180)    # f32, per (c, hw)

    w1 = params["fc1_w"].T.astype(jnp.bfloat16)                  # (180, 50)
    b1 = params["fc1_b"].reshape(1, 50)                          # f32
    # fc2 lane-padded to 128 classes; padded bias = -1e30 so the padded
    # classes vanish in the log-softmax normalization.
    w2 = jnp.pad(params["fc2_w"].T, ((0, 0), (0, 118))).astype(jnp.bfloat16)
    b2 = jnp.pad(params["fc2_b"].reshape(1, 10), ((0, 0), (0, 118)),
                 constant_values=-1e30)                          # f32 (1, 128)

    out = pl.pallas_call(
        fused_net_kernel,
        out_shape=jax.ShapeDtypeStruct((b_pad, 128), jnp.float32),
        grid_spec=pltpu.PrefetchScalarGridSpec(
            num_scalar_prefetch=0,
            grid=(nt,),
            in_specs=[
                pl.BlockSpec((4 * tb, 900), lambda i: (i, 0)),
                pl.BlockSpec((900, 180), lambda i: (0, 0)),
                pl.BlockSpec((1, 180), lambda i: (0, 0)),
                pl.BlockSpec((180, 50), lambda i: (0, 0)),
                pl.BlockSpec((1, 50), lambda i: (0, 0)),
                pl.BlockSpec((50, 128), lambda i: (0, 0)),
                pl.BlockSpec((1, 128), lambda i: (0, 0)),
            ],
            out_specs=pl.BlockSpec((tb, 128), lambda i: (i, 0)),
        ),
        compiler_params=pltpu.CompilerParams(
            dimension_semantics=("parallel",)),
    )(patches, w_big, b_conv, w1, b1, w2, b2)

    return out[:batch, :10]


def net_forward_ref(x, params):
    """Pure-JAX f32 reference of the torch module (for correctness check)."""
    conv = jax.lax.conv_general_dilated(
        x, params["conv_w"], window_strides=(2, 2), padding="VALID",
        dimension_numbers=("NCHW", "OIHW", "NCHW"))
    conv = conv + params["conv_b"].reshape(1, 5, 1, 1)
    pooled = jax.lax.reduce_window(conv, -jnp.inf, jax.lax.max,
                                   (1, 1, 2, 2), (1, 1, 2, 2), "VALID")
    act = jnp.maximum(pooled, 0.0).reshape(x.shape[0], 180)      # (C,H,W) flatten
    h = jnp.maximum(act @ params["fc1_w"].T + params["fc1_b"], 0.0)
    logits = h @ params["fc2_w"].T + params["fc2_b"]
    return jax.nn.log_softmax(logits, axis=-1)


if __name__ == "__main__":
    key = jax.random.PRNGKey(0)
    pkey, xkey = jax.random.split(key)
    params = init_params(pkey)

    # MNIST-like input: batch=2, 1 channel, 28x28 (required so flatten == 180).
    x = jax.random.normal(xkey, (2, 1, 28, 28), dtype=jnp.float32)

    out = net_forward(x, params)
    jax.block_until_ready(out)

    assert out.shape == (2, 10), out.shape
    # log-softmax rows should exponentiate-sum to 1
    row_sums = jnp.sum(jnp.exp(out), axis=1)
    assert bool(jnp.all(jnp.abs(row_sums - 1.0) < 1e-2)), row_sums
    # match the f32 pure-JAX reference (loose tol: bf16 MXU operands)
    ref = net_forward_ref(x, params)
    assert bool(jnp.allclose(out, ref, atol=5e-2, rtol=5e-2)), (out, ref)

    # Also exercise the multi-step grid / batch-padding path.
    x2 = jax.random.normal(jax.random.PRNGKey(1), (20, 1, 28, 28), jnp.float32)
    out2 = net_forward(x2, params)
    jax.block_until_ready(out2)
    ref2 = net_forward_ref(x2, params)
    assert out2.shape == (20, 10), out2.shape
    assert bool(jnp.allclose(out2, ref2, atol=5e-2, rtol=5e-2))

    print("KERNEL_OK")
</pallas_src>

<mosaic_0001>
module attributes {stable_mosaic.version = 11 : i64} {
  func.func @fused_net_kernel(%arg0: i32, %arg1: memref<32x900xbf16, #tpu.memory_space<vmem>>, %arg2: memref<900x180xbf16, #tpu.memory_space<vmem>>, %arg3: memref<1x180xf32, #tpu.memory_space<vmem>>, %arg4: memref<180x50xbf16, #tpu.memory_space<vmem>>, %arg5: memref<1x50xf32, #tpu.memory_space<vmem>>, %arg6: memref<50x128xbf16, #tpu.memory_space<vmem>>, %arg7: memref<1x128xf32, #tpu.memory_space<vmem>>, %arg8: memref<8x128xf32, #tpu.memory_space<vmem>>) attributes {dimension_semantics = [#tpu.dimension_semantics<parallel>], iteration_bounds = array<i64: 1>, scalar_prefetch = 0 : i64, scratch_operands = 0 : i64, tpu.core_type = #tpu.core_type<tc>, window_params = [{transform_indices = @transform_0, window_bounds = array<i64: 32, 900>}, {pipeline_mode = #tpu.pipeline_mode<synchronous>, transform_indices = @transform_1, window_bounds = array<i64: 900, 180>}, {pipeline_mode = #tpu.pipeline_mode<synchronous>, transform_indices = @transform_2, window_bounds = array<i64: 1, 180>}, {pipeline_mode = #tpu.pipeline_mode<synchronous>, transform_indices = @transform_3, window_bounds = array<i64: 180, 50>}, {pipeline_mode = #tpu.pipeline_mode<synchronous>, transform_indices = @transform_4, window_bounds = array<i64: 1, 50>}, {pipeline_mode = #tpu.pipeline_mode<synchronous>, transform_indices = @transform_5, window_bounds = array<i64: 50, 128>}, {pipeline_mode = #tpu.pipeline_mode<synchronous>, transform_indices = @transform_6, window_bounds = array<i64: 1, 128>}, {transform_indices = @transform_7, window_bounds = array<i64: 8, 128>}]} {
    %c0 = arith.constant 0 : index
    %c0_0 = arith.constant 0 : index
    %0 = vector.load %arg1[%c0, %c0_0] : memref<32x900xbf16, #tpu.memory_space<vmem>>, vector<32x900xbf16>
    %c0_1 = arith.constant 0 : index
    %c0_2 = arith.constant 0 : index
    %1 = vector.load %arg2[%c0_1, %c0_2] : memref<900x180xbf16, #tpu.memory_space<vmem>>, vector<900x180xbf16>
    %cst = arith.constant dense<0.000000e+00> : vector<32x180xf32>
    %2 = tpu.matmul %0, %1, %cst {dimension_numbers = #tpu.dot_dimension_numbers<[1], [0], [0], [1], [0, 0, 1, 1], [], []>} : vector<32x900xbf16>, vector<900x180xbf16>, vector<32x180xf32> -> vector<32x180xf32>
    %3 = vector.extract_strided_slice %2 {offsets = [0, 0], sizes = [8, 180], strides = [1, 1]} : vector<32x180xf32> to vector<8x180xf32>
    %4 = vector.extract_strided_slice %2 {offsets = [8, 0], sizes = [8, 180], strides = [1, 1]} : vector<32x180xf32> to vector<8x180xf32>
    %5 = arith.maximumf %3, %4 : vector<8x180xf32>
    %6 = vector.extract_strided_slice %2 {offsets = [16, 0], sizes = [8, 180], strides = [1, 1]} : vector<32x180xf32> to vector<8x180xf32>
    %7 = arith.maximumf %5, %6 : vector<8x180xf32>
    %8 = vector.extract_strided_slice %2 {offsets = [24, 0], sizes = [8, 180], strides = [1, 1]} : vector<32x180xf32> to vector<8x180xf32>
    %9 = arith.maximumf %7, %8 : vector<8x180xf32>
    %c0_3 = arith.constant 0 : index
    %c0_4 = arith.constant 0 : index
    %10 = vector.load %arg3[%c0_3, %c0_4] : memref<1x180xf32, #tpu.memory_space<vmem>>, vector<1x180xf32>
    %11 = vector.broadcast %10 : vector<1x180xf32> to vector<8x180xf32>
    %12 = arith.addf %9, %11 : vector<8x180xf32>
    %cst_5 = arith.constant 0.000000e+00 : f32
    %13 = vector.broadcast %cst_5 : f32 to vector<8x180xf32>
    %14 = arith.maximumf %12, %13 : vector<8x180xf32>
    %15 = arith.truncf %14 : vector<8x180xf32> to vector<8x180xbf16>
    %c0_6 = arith.constant 0 : index
    %c0_7 = arith.constant 0 : index
    %16 = vector.load %arg4[%c0_6, %c0_7] : memref<180x50xbf16, #tpu.memory_space<vmem>>, vector<180x50xbf16>
    %cst_8 = arith.constant dense<0.000000e+00> : vector<8x50xf32>
    %17 = tpu.matmul %15, %16, %cst_8 {dimension_numbers = #tpu.dot_dimension_numbers<[1], [0], [0], [1], [0, 0, 1, 1], [], []>} : vector<8x180xbf16>, vector<180x50xbf16>, vector<8x50xf32> -> vector<8x50xf32>
    %c0_9 = arith.constant 0 : index
    %c0_10 = arith.constant 0 : index
    %18 = vector.load %arg5[%c0_9, %c0_10] : memref<1x50xf32, #tpu.memory_space<vmem>>, vector<1x50xf32>
    %19 = vector.broadcast %18 : vector<1x50xf32> to vector<8x50xf32>
    %20 = arith.addf %17, %19 : vector<8x50xf32>
    %cst_11 = arith.constant 0.000000e+00 : f32
    %21 = vector.broadcast %cst_11 : f32 to vector<8x50xf32>
    %22 = arith.maximumf %20, %21 : vector<8x50xf32>
    %23 = arith.truncf %22 : vector<8x50xf32> to vector<8x50xbf16>
    %c0_12 = arith.constant 0 : index
    %c0_13 = arith.constant 0 : index
    %24 = vector.load %arg6[%c0_12, %c0_13] : memref<50x128xbf16, #tpu.memory_space<vmem>>, vector<50x128xbf16>
    %cst_14 = arith.constant dense<0.000000e+00> : vector<8x128xf32>
    %25 = tpu.matmul %23, %24, %cst_14 {dimension_numbers = #tpu.dot_dimension_numbers<[1], [0], [0], [1], [0, 0, 1, 1], [], []>} : vector<8x50xbf16>, vector<50x128xbf16>, vector<8x128xf32> -> vector<8x128xf32>
    %c0_15 = arith.constant 0 : index
    %c0_16 = arith.constant 0 : index
    %26 = vector.load %arg7[%c0_15, %c0_16] : memref<1x128xf32, #tpu.memory_space<vmem>>, vector<1x128xf32>
    %27 = vector.broadcast %26 : vector<1x128xf32> to vector<8x128xf32>
    %28 = arith.addf %25, %27 : vector<8x128xf32>
    %cst_17 = arith.constant dense<0xFF800000> : vector<8xf32>
    %29 = vector.multi_reduction <maximumf>, %28, %cst_17 [1] : vector<8x128xf32> to vector<8xf32>
    %30 = vector.shape_cast %29 : vector<8xf32> to vector<8x1xf32>
    %31 = vector.broadcast %30 : vector<8x1xf32> to vector<8x128xf32>
    %32 = arith.subf %28, %31 : vector<8x128xf32>
    %33 = math.exp %32 : vector<8x128xf32>
    %cst_18 = arith.constant dense<0.000000e+00> : vector<8xf32>
    %34 = vector.multi_reduction <add>, %33, %cst_18 [1] : vector<8x128xf32> to vector<8xf32>
    %35 = vector.shape_cast %34 : vector<8xf32> to vector<8x1xf32>
    %36 = math.log %35 : vector<8x1xf32>
    %37 = vector.broadcast %36 : vector<8x1xf32> to vector<8x128xf32>
    %38 = arith.subf %32, %37 : vector<8x128xf32>
    %c0_19 = arith.constant 0 : index
    %c0_20 = arith.constant 0 : index
    %39 = vector.load %arg8[%c0_19, %c0_20] : memref<8x128xf32, #tpu.memory_space<vmem>>, vector<8x128xf32>
    tpu.vector_store %arg8[%c0_19, %c0_20], %38 {strides = array<i32>} : memref<8x128xf32, #tpu.memory_space<vmem>>, vector<8x128xf32>,
    return
  }
  func.func @transform_0(%arg0: i32) -> (i32, i32) {
    %c0_i32 = arith.constant 0 : i32
    %c0_i32_0 = arith.constant 0 : i32
    return %arg0, %c0_i32 : i32, i32
  }
  func.func @transform_1(%arg0: i32) -> (i32, i32) {
    %c0_i32 = arith.constant 0 : i32
    %c0_i32_0 = arith.constant 0 : i32
    %c0_i32_1 = arith.constant 0 : i32
    return %c0_i32, %c0_i32_0 : i32, i32
  }
  func.func @transform_2(%arg0: i32) -> (i32, i32) {
    %c0_i32 = arith.constant 0 : i32
    %c0_i32_0 = arith.constant 0 : i32
    %c0_i32_1 = arith.constant 0 : i32
    return %c0_i32, %c0_i32_0 : i32, i32
  }
  func.func @transform_3(%arg0: i32) -> (i32, i32) {
    %c0_i32 = arith.constant 0 : i32
    %c0_i32_0 = arith.constant 0 : i32
    %c0_i32_1 = arith.constant 0 : i32
    return %c0_i32, %c0_i32_0 : i32, i32
  }
  func.func @transform_4(%arg0: i32) -> (i32, i32) {
    %c0_i32 = arith.constant 0 : i32
    %c0_i32_0 = arith.constant 0 : i32
    %c0_i32_1 = arith.constant 0 : i32
    return %c0_i32, %c0_i32_0 : i32, i32
  }
  func.func @transform_5(%arg0: i32) -> (i32, i32) {
    %c0_i32 = arith.constant 0 : i32
    %c0_i32_0 = arith.constant 0 : i32
    %c0_i32_1 = arith.constant 0 : i32
    return %c0_i32, %c0_i32_0 : i32, i32
  }
  func.func @transform_6(%arg0: i32) -> (i32, i32) {
    %c0_i32 = arith.constant 0 : i32
    %c0_i32_0 = arith.constant 0 : i32
    %c0_i32_1 = arith.constant 0 : i32
    return %c0_i32, %c0_i32_0 : i32, i32
  }
  func.func @transform_7(%arg0: i32) -> (i32, i32) {
    %c0_i32 = arith.constant 0 : i32
    %c0_i32_0 = arith.constant 0 : i32
    return %arg0, %c0_i32 : i32, i32
  }
}

</mosaic_0001>

<llo_original>
// kernel: net_forward.1
$region0: #{net_forward.1}
  #allocation0 [shape = 'u32[]', space=smem, size = 0x4, offset = 0x4, fixed_abs, tag = 'smem constant byte address 0x4 - core index']
  #allocation1 [shape = 'u32[144,128]{1,0:T(1,128)}', space=vmem, size = 0x12000, scoped, tag = 'internal scratch']
  %s0 = inlined_call_operand.vmem [shape: bf16[32,900], index: 0, kind: input, shape index: {}]
  %s1 = inlined_call_operand.vmem [shape: bf16[900,180], index: 1, kind: input, shape index: {}]
  %s2 = inlined_call_operand.vmem [shape: f32[1,180], index: 2, kind: input, shape index: {}]
  %s3 = inlined_call_operand.vmem [shape: bf16[180,50], index: 3, kind: input, shape index: {}]
  %s4 = inlined_call_operand.vmem [shape: f32[1,50], index: 4, kind: input, shape index: {}]
  %s5 = inlined_call_operand.vmem [shape: bf16[50,128], index: 5, kind: input, shape index: {}]
  %s6 = inlined_call_operand.vmem [shape: f32[1,128], index: 6, kind: input, shape index: {}]
  %s7 = inlined_call_operand.vmem [shape: f32[8,128], index: 7, kind: output, shape index: {}]
  %s8 = sld [smem:[#allocation0]]
  $region38: #{net_forward.1} parent=0
    _
  %s10 = ssub.s32 1, %s8
  %s11 = scalar_select 0, %s10, %s8
  // Predicated region
  $region2: #{net_forward.1} parent=0 // pred_check
    _
  $region3: #{net_forward.1} parent=0 // pred_check_branch
    %13 = sbr.rel (0) target = $region5
  $region4: #{net_forward.1} parent=0 // pred_region
    _
  $region5: #{net_forward.1} parent=0 // pred_fallthru
    _
  // Predicated region
  $region6: #{net_forward.1} parent=0 // pred_check
    _
  $region7: #{net_forward.1} parent=0 // pred_check_branch
    %15 = sbr.rel (0) target = $region9
  $region8: #{net_forward.1} parent=0 // pred_region
    _
  $region9: #{net_forward.1} parent=0 // pred_fallthru
    _
  // Predicated region
  $region10: #{net_forward.1} parent=0 // pred_check
    _
  $region11: #{net_forward.1} parent=0 // pred_check_branch
    %17 = sbr.rel (0) target = $region13
  $region12: #{net_forward.1} parent=0 // pred_region
    _
  $region13: #{net_forward.1} parent=0 // pred_fallthru
    _
  // Predicated region
  $region14: #{net_forward.1} parent=0 // pred_check
    _
  $region15: #{net_forward.1} parent=0 // pred_check_branch
    %19 = sbr.rel (0) target = $region17
  $region16: #{net_forward.1} parent=0 // pred_region
    _
  $region17: #{net_forward.1} parent=0 // pred_fallthru
    _
  // Predicated region
  $region18: #{net_forward.1} parent=0 // pred_check
    _
  $region19: #{net_forward.1} parent=0 // pred_check_branch
    %21 = sbr.rel (0) target = $region21
  $region20: #{net_forward.1} parent=0 // pred_region
    _
  $region21: #{net_forward.1} parent=0 // pred_fallthru
    _
  // Predicated region
  $region22: #{net_forward.1} parent=0 // pred_check
    _
  $region23: #{net_forward.1} parent=0 // pred_check_branch
    %23 = sbr.rel (0) target = $region25
  $region24: #{net_forward.1} parent=0 // pred_region
    _
  $region25: #{net_forward.1} parent=0 // pred_fallthru
    _
  // Predicated region
  $region26: #{net_forward.1} parent=0 // pred_check
    _
  $region27: #{net_forward.1} parent=0 // pred_check_branch
    %25 = sbr.rel (0) target = $region29
  $region28: #{net_forward.1} parent=0 // pred_region
    _
  $region29: #{net_forward.1} parent=0 // pred_fallthru
    _
  %v27 = vld [vmem:[%s0] sm:$0xff]
  %v28 = vld [vmem:[%s0 + $0x8] sm:$0xff]
  %v29 = vld [vmem:[%s0 + $0x10] sm:$0xff]
  %v30 = vld [vmem:[%s0 + $0x18] sm:$0xff]
  %v31 = vld [vmem:[%s0 + $0x20] sm:$0xff]
  %v32 = vld [vmem:[%s0 + $0x28] sm:$0xff]
  %v33 = vld [vmem:[%s0 + $0x30] sm:$0xff]
  %v34 = vld [vmem:[%s0 + $0x38] sm:$0xff]
  %v35 = vld [vmem:[%s0 + $0x40] sm:$0xff]
  %v36 = vld [vmem:[%s0 + $0x48] sm:$0xff]
  %v37 = vld [vmem:[%s0 + $0x50] sm:$0xff]
  %v38 = vld [vmem:[%s0 + $0x58] sm:$0xff]
  %v39 = vld [vmem:[%s0 + $0x60] sm:$0xff]
  %v40 = vld [vmem:[%s0 + $0x68] sm:$0xff]
  %v41 = vld [vmem:[%s0 + $0x70] sm:$0xff]
  %v42 = vld [vmem:[%s0 + $0x78] sm:$0xff]
  %v43 = vld [vmem:[%s1] sm:$0xff]
  %v44 = vld [vmem:[%s1 + $0x8] sm:$0xff]
  %v45 = vld [vmem:[%s1 + $0x10] sm:$0xff]
  %v46 = vld [vmem:[%s1 + $0x18] sm:$0xff]
  %v47 = vld [vmem:[%s1 + $0x20] sm:$0xff]
  %v48 = vld [vmem:[%s1 + $0x28] sm:$0xff]
  %v49 = vld [vmem:[%s1 + $0x30] sm:$0xff]
  %v50 = vld [vmem:[%s1 + $0x38] sm:$0xff]
  %v51 = vld [vmem:[%s1 + $0x40] sm:$0xff]
  %v52 = vld [vmem:[%s1 + $0x48] sm:$0xff]
  %v53 = vld [vmem:[%s1 + $0x50] sm:$0xff]
  %v54 = vld [vmem:[%s1 + $0x58] sm:$0xff]
  %v55 = vld [vmem:[%s1 + $0x60] sm:$0xff]
  %v56 = vld [vmem:[%s1 + $0x68] sm:$0xff]
  %v57 = vld [vmem:[%s1 + $0x70] sm:$0xff]
  %v58 = vld [vmem:[%s1 + $0x78] sm:$0xff]
  %v59 = vld [vmem:[%s1 + $0x80] sm:$0xff]
  %v60 = vld [vmem:[%s1 + $0x88] sm:$0xff]
  %v61 = vld [vmem:[%s1 + $0x90] sm:$0xff]
  %v62 = vld [vmem:[%s1 + $0x98] sm:$0xff]
  %v63 = vld [vmem:[%s1 + $0xa0] sm:$0xff]
  %v64 = vld [vmem:[%s1 + $0xa8] sm:$0xff]
  %v65 = vld [vmem:[%s1 + $0xb0] sm:$0xff]
  %v66 = vld [vmem:[%s1 + $0xb8] sm:$0xff]
  %v67 = vld [vmem:[%s1 + $0xc0] sm:$0xff]
  %v68 = vld [vmem:[%s1 + $0xc8] sm:$0xff]
  %v69 = vld [vmem:[%s1 + $0xd0] sm:$0xff]
  %v70 = vld [vmem:[%s1 + $0xd8] sm:$0xff]
  %v71 = vld [vmem:[%s1 + $0xe0] sm:$0xff]
  %v72 = vld [vmem:[%s1 + $0xe8] sm:$0xff]
  %v73 = vld [vmem:[%s1 + $0xf0] sm:$0xff]
  %v74 = vld [vmem:[%s1 + $0xf8] sm:$0xff]
  %v75 = vld [vmem:[%s1 + $0x100] sm:$0xff]
  %v76 = vld [vmem:[%s1 + $0x108] sm:$0xff]
  %v77 = vld [vmem:[%s1 + $0x110] sm:$0xff]
  %v78 = vld [vmem:[%s1 + $0x118] sm:$0xff]
  %v79 = vld [vmem:[%s1 + $0x120] sm:$0xff]
  %v80 = vld [vmem:[%s1 + $0x128] sm:$0xff]
  %v81 = vld [vmem:[%s1 + $0x130] sm:$0xff]
  %v82 = vld [vmem:[%s1 + $0x138] sm:$0xff]
  %v83 = vld [vmem:[%s1 + $0x140] sm:$0xff]
  %v84 = vld [vmem:[%s1 + $0x148] sm:$0xff]
  %v85 = vld [vmem:[%s1 + $0x150] sm:$0xff]
  %v86 = vld [vmem:[%s1 + $0x158] sm:$0xff]
  %v87 = vld [vmem:[%s1 + $0x160] sm:$0xff]
  %v88 = vld [vmem:[%s1 + $0x168] sm:$0xff]
  %v89 = vld [vmem:[%s1 + $0x170] sm:$0xff]
  %v90 = vld [vmem:[%s1 + $0x178] sm:$0xff]
  %v91 = vld [vmem:[%s1 + $0x180] sm:$0xff]
  %v92 = vld [vmem:[%s1 + $0x188] sm:$0xff]
  %v93 = vld [vmem:[%s1 + $0x190] sm:$0xff]
  %v94 = vld [vmem:[%s1 + $0x198] sm:$0xff]
  %v95 = vld [vmem:[%s1 + $0x1a0] sm:$0xff]
  %v96 = vld [vmem:[%s1 + $0x1a8] sm:$0xff]
  %v97 = vld [vmem:[%s1 + $0x1b0] sm:$0xff]
  %v98 = vld [vmem:[%s1 + $0x1b8] sm:$0xff]
  %v99 = vld [vmem:[%s1 + $0x1c0] sm:$0xff]
  %v100 = vld [vmem:[%s1 + $0x1c8] sm:$0xff]
  %v101 = vld [vmem:[%s1 + $0x1d0] sm:$0xff]
  %v102 = vld [vmem:[%s1 + $0x1d8] sm:$0xff]
  %v103 = vld [vmem:[%s1 + $0x1e0] sm:$0xff]
  %v104 = vld [vmem:[%s1 + $0x1e8] sm:$0xff]
  %v105 = vld [vmem:[%s1 + $0x1f0] sm:$0xff]
  %v106 = vld [vmem:[%s1 + $0x1f8] sm:$0xff]
  %v107 = vld [vmem:[%s1 + $0x200] sm:$0xff]
  %v108 = vld [vmem:[%s1 + $0x208] sm:$0xff]
  %v109 = vld [vmem:[%s1 + $0x210] sm:$0xff]
  %v110 = vld [vmem:[%s1 + $0x218] sm:$0xff]
  %v111 = vld [vmem:[%s1 + $0x220] sm:$0xff]
  %v112 = vld [vmem:[%s1 + $0x228] sm:$0xff]
  %v113 = vld [vmem:[%s1 + $0x230] sm:$0xff]
  %v114 = vld [vmem:[%s1 + $0x238] sm:$0xff]
  %v115 = vld [vmem:[%s1 + $0x240] sm:$0xff]
  %v116 = vld [vmem:[%s1 + $0x248] sm:$0xff]
  %v117 = vld [vmem:[%s1 + $0x250] sm:$0xff]
  %v118 = vld [vmem:[%s1 + $0x258] sm:$0xff]
  %v119 = vld [vmem:[%s1 + $0x260] sm:$0xff]
  %v120 = vld [vmem:[%s1 + $0x268] sm:$0xff]
  %v121 = vld [vmem:[%s1 + $0x270] sm:$0xff]
  %v122 = vld [vmem:[%s1 + $0x278] sm:$0xff]
  %v123 = vld [vmem:[%s1 + $0x280] sm:$0xff]
  %v124 = vld [vmem:[%s1 + $0x288] sm:$0xff]
  %v125 = vld [vmem:[%s1 + $0x290] sm:$0xff]
  %v126 = vld [vmem:[%s1 + $0x298] sm:$0xff]
  %v127 = vld [vmem:[%s1 + $0x2a0] sm:$0xff]
  %v128 = vld [vmem:[%s1 + $0x2a8] sm:$0xff]
  %v129 = vld [vmem:[%s1 + $0x2b0] sm:$0xff]
  %v130 = vld [vmem:[%s1 + $0x2b8] sm:$0xff]
  %v131 = vld [vmem:[%s1 + $0x2c0] sm:$0xff]
  %v132 = vld [vmem:[%s1 + $0x2c8] sm:$0xff]
  %v133 = vld [vmem:[%s1 + $0x2d0] sm:$0xff]
  %v134 = vld [vmem:[%s1 + $0x2d8] sm:$0xff]
  %v135 = vld [vmem:[%s1 + $0x2e0] sm:$0xff]
  %v136 = vld [vmem:[%s1 + $0x2e8] sm:$0xff]
  %v137 = vld [vmem:[%s1 + $0x2f0] sm:$0xff]
  %v138 = vld [vmem:[%s1 + $0x2f8] sm:$0xff]
  %v139 = vld [vmem:[%s1 + $0x300] sm:$0xff]
  %v140 = vld [vmem:[%s1 + $0x308] sm:$0xff]
  %v141 = vld [vmem:[%s1 + $0x310] sm:$0xff]
  %v142 = vld [vmem:[%s1 + $0x318] sm:$0xff]
  %v143 = vld [vmem:[%s1 + $0x320] sm:$0xff]
  %v144 = vld [vmem:[%s1 + $0x328] sm:$0xff]
  %v145 = vld [vmem:[%s1 + $0x330] sm:$0xff]
  %v146 = vld [vmem:[%s1 + $0x338] sm:$0xff]
  %v147 = vld [vmem:[%s1 + $0x340] sm:$0xff]
  %v148 = vld [vmem:[%s1 + $0x348] sm:$0xff]
  %v149 = vld [vmem:[%s1 + $0x350] sm:$0xff]
  %v150 = vld [vmem:[%s1 + $0x358] sm:$0xff]
  %v151 = vld [vmem:[%s1 + $0x360] sm:$0xff]
  %v152 = vld [vmem:[%s1 + $0x368] sm:$0xff]
  %v153 = vld [vmem:[%s1 + $0x370] sm:$0xff]
  %v154 = vld [vmem:[%s1 + $0x378] sm:$0xff]
  %v155 = vld [vmem:[%s1 + $0x380] sm:$0x33]
  %v172 = vunpack.c.l.b16 %v27
  %v173 = vunpack.c.h.b16 %v27
  %v174 = vunpack.c.l.b16 %v28
  %v175 = vunpack.c.h.b16 %v28
  %v176 = vunpack.c.l.b16 %v29
  %v177 = vunpack.c.h.b16 %v29
  %v178 = vunpack.c.l.b16 %v30
  %v179 = vunpack.c.h.b16 %v30
  %v180 = vunpack.c.l.b16 %v31
  %v181 = vunpack.c.h.b16 %v31
  %v182 = vunpack.c.l.b16 %v32
  %v183 = vunpack.c.h.b16 %v32
  %v184 = vunpack.c.l.b16 %v33
  %v185 = vunpack.c.h.b16 %v33
  %v186 = vunpack.c.l.b16 %v34
  %v187 = vunpack.c.h.b16 %v34
  %v188 = vunpack.c.l.b16 %v35
  %v189 = vunpack.c.h.b16 %v35
  %v190 = vunpack.c.l.b16 %v36
  %v191 = vunpack.c.h.b16 %v36
  %v192 = vunpack.c.l.b16 %v37
  %v193 = vunpack.c.h.b16 %v37
  %v194 = vunpack.c.l.b16 %v38
  %v195 = vunpack.c.h.b16 %v38
  %v196 = vunpack.c.l.b16 %v39
  %v197 = vunpack.c.h.b16 %v39
  %v198 = vunpack.c.l.b16 %v40
  %v199 = vunpack.c.h.b16 %v40
  %v200 = vunpack.c.l.b16 %v41
  %v201 = vunpack.c.h.b16 %v41
  %v202 = vunpack.c.l.b16 %v42
  %v203 = vunpack.c.h.b16 %v42
  %v204 = vpack.c.b16 %v180, %v172
  %v205 = vpack.c.b16 %v181, %v173
  %v206 = vpack.c.b16 %v182, %v174
  %v207 = vpack.c.b16 %v183, %v175
  %v208 = vpack.c.b16 %v184, %v176
  %v209 = vpack.c.b16 %v185, %v177
  %v210 = vpack.c.b16 %v186, %v178
  %v211 = vpack.c.b16 %v187, %v179
  %v212 = vpack.c.b16 %v196, %v188
  %v213 = vpack.c.b16 %v197, %v189
  %v214 = vpack.c.b16 %v198, %v190
  %v215 = vpack.c.b16 %v199, %v191
  %v216 = vpack.c.b16 %v200, %v192
  %v217 = vpack.c.b16 %v201, %v193
  %v218 = vpack.c.b16 %v202, %v194
  %v219 = vpack.c.b16 %v203, %v195
  %v347 = vunpack.c.l.b16 %v43
  %v348 = vunpack.c.h.b16 %v43
  %v349 = vunpack.c.l.b16 %v44
  %v350 = vunpack.c.h.b16 %v44
  %v351 = vunpack.c.l.b16 %v45
  %v352 = vunpack.c.h.b16 %v45
  %v353 = vunpack.c.l.b16 %v46
  %v354 = vunpack.c.h.b16 %v46
  %v355 = vunpack.c.l.b16 %v47
  %v356 = vunpack.c.h.b16 %v47
  %v357 = vunpack.c.l.b16 %v48
  %v358 = vunpack.c.h.b16 %v48
  %v359 = vunpack.c.l.b16 %v49
  %v360 = vunpack.c.h.b16 %v49
  %v361 = vunpack.c.l.b16 %v50
  %v362 = vunpack.c.h.b16 %v50
  %v363 = vunpack.c.l.b16 %v51
  %v364 = vunpack.c.h.b16 %v51
  %v365 = vunpack.c.l.b16 %v52
  %v366 = vunpack.c.h.b16 %v52
  %v367 = vunpack.c.l.b16 %v53
  %v368 = vunpack.c.h.b16 %v53
  %v369 = vunpack.c.l.b16 %v54
  %v370 = vunpack.c.h.b16 %v54
  %v371 = vunpack.c.l.b16 %v55
  %v372 = vunpack.c.h.b16 %v55
  %v373 = vunpack.c.l.b16 %v56
  %v374 = vunpack.c.h.b16 %v56
  %v375 = vunpack.c.l.b16 %v57
  %v376 = vunpack.c.h.b16 %v57
  %v377 = vunpack.c.l.b16 %v58
  %v378 = vunpack.c.h.b16 %v58
  %v379 = vunpack.c.l.b16 %v59
  %v380 = vunpack.c.h.b16 %v59
  %v381 = vunpack.c.l.b16 %v60
  %v382 = vunpack.c.h.b16 %v60
  %v383 = vunpack.c.l.b16 %v61
  %v384 = vunpack.c.h.b16 %v61
  %v385 = vunpack.c.l.b16 %v62
  %v386 = vunpack.c.h.b16 %v62
  %v387 = vunpack.c.l.b16 %v63
  %v388 = vunpack.c.h.b16 %v63
  %v389 = vunpack.c.l.b16 %v64
  %v390 = vunpack.c.h.b16 %v64
  %v391 = vunpack.c.l.b16 %v65
  %v392 = vunpack.c.h.b16 %v65
  %v393 = vunpack.c.l.b16 %v66
  %v394 = vunpack.c.h.b16 %v66
  %v395 = vunpack.c.l.b16 %v67
  %v396 = vunpack.c.h.b16 %v67
  %v397 = vunpack.c.l.b16 %v68
  %v398 = vunpack.c.h.b16 %v68
  %v399 = vunpack.c.l.b16 %v69
  %v400 = vunpack.c.h.b16 %v69
  %v401 = vunpack.c.l.b16 %v70
  %v402 = vunpack.c.h.b16 %v70
  %v403 = vunpack.c.l.b16 %v71
  %v404 = vunpack.c.h.b16 %v71
  %v405 = vunpack.c.l.b16 %v72
  %v406 = vunpack.c.h.b16 %v72
  %v407 = vunpack.c.l.b16 %v73
  %v408 = vunpack.c.h.b16 %v73
  %v409 = vunpack.c.l.b16 %v74
  %v410 = vunpack.c.h.b16 %v74
  %v411 = vunpack.c.l.b16 %v75
  %v412 = vunpack.c.h.b16 %v75
  %v413 = vunpack.c.l.b16 %v76
  %v414 = vunpack.c.h.b16 %v76
  %v415 = vunpack.c.l.b16 %v77
  %v416 = vunpack.c.h.b16 %v77
  %v417 = vunpack.c.l.b16 %v78
  %v418 = vunpack.c.h.b16 %v78
  %v419 = vunpack.c.l.b16 %v79
  %v420 = vunpack.c.h.b16 %v79
  %v421 = vunpack.c.l.b16 %v80
  %v422 = vunpack.c.h.b16 %v80
  %v423 = vunpack.c.l.b16 %v81
  %v424 = vunpack.c.h.b16 %v81
  %v425 = vunpack.c.l.b16 %v82
  %v426 = vunpack.c.h.b16 %v82
  %v427 = vunpack.c.l.b16 %v83
  %v428 = vunpack.c.h.b16 %v83
  %v429 = vunpack.c.l.b16 %v84
  %v430 = vunpack.c.h.b16 %v84
  %v431 = vunpack.c.l.b16 %v85
  %v432 = vunpack.c.h.b16 %v85
  %v433 = vunpack.c.l.b16 %v86
  %v434 = vunpack.c.h.b16 %v86
  %v435 = vunpack.c.l.b16 %v87
  %v436 = vunpack.c.h.b16 %v87
  %v437 = vunpack.c.l.b16 %v88
  %v438 = vunpack.c.h.b16 %v88
  %v439 = vunpack.c.l.b16 %v89
  %v440 = vunpack.c.h.b16 %v89
  %v441 = vunpack.c.l.b16 %v90
  %v442 = vunpack.c.h.b16 %v90
  %v443 = vunpack.c.l.b16 %v91
  %v444 = vunpack.c.h.b16 %v91
  %v445 = vunpack.c.l.b16 %v92
  %v446 = vunpack.c.h.b16 %v92
  %v447 = vunpack.c.l.b16 %v93
  %v448 = vunpack.c.h.b16 %v93
  %v449 = vunpack.c.l.b16 %v94
  %v450 = vunpack.c.h.b16 %v94
  %v451 = vunpack.c.l.b16 %v95
  %v452 = vunpack.c.h.b16 %v95
  %v453 = vunpack.c.l.b16 %v96
  %v454 = vunpack.c.h.b16 %v96
  %v455 = vunpack.c.l.b16 %v97
  %v456 = vunpack.c.h.b16 %v97
  %v457 = vunpack.c.l.b16 %v98
  %v458 = vunpack.c.h.b16 %v98
  %v459 = vunpack.c.l.b16 %v99
  %v460 = vunpack.c.h.b16 %v99
  %v461 = vunpack.c.l.b16 %v100
  %v462 = vunpack.c.h.b16 %v100
  %v463 = vunpack.c.l.b16 %v101
  %v464 = vunpack.c.h.b16 %v101
  %v465 = vunpack.c.l.b16 %v102
  %v466 = vunpack.c.h.b16 %v102
  %v467 = vunpack.c.l.b16 %v103
  %v468 = vunpack.c.h.b16 %v103
  %v469 = vunpack.c.l.b16 %v104
  %v470 = vunpack.c.h.b16 %v104
  %v471 = vunpack.c.l.b16 %v105
  %v472 = vunpack.c.h.b16 %v105
  %v473 = vunpack.c.l.b16 %v106
  %v474 = vunpack.c.h.b16 %v106
  %v475 = vunpack.c.l.b16 %v107
  %v476 = vunpack.c.h.b16 %v107
  %v477 = vunpack.c.l.b16 %v108
  %v478 = vunpack.c.h.b16 %v108
  %v479 = vunpack.c.l.b16 %v109
  %v480 = vunpack.c.h.b16 %v109
  %v481 = vunpack.c.l.b16 %v110
  %v482 = vunpack.c.h.b16 %v110
  %v483 = vunpack.c.l.b16 %v111
  %v484 = vunpack.c.h.b16 %v111
  %v485 = vunpack.c.l.b16 %v112
  %v486 = vunpack.c.h.b16 %v112
  %v487 = vunpack.c.l.b16 %v113
  %v488 = vunpack.c.h.b16 %v113
  %v489 = vunpack.c.l.b16 %v114
  %v490 = vunpack.c.h.b16 %v114
  %v491 = vunpack.c.l.b16 %v115
  %v492 = vunpack.c.h.b16 %v115
  %v493 = vunpack.c.l.b16 %v116
  %v494 = vunpack.c.h.b16 %v116
  %v495 = vunpack.c.l.b16 %v117
  %v496 = vunpack.c.h.b16 %v117
  %v497 = vunpack.c.l.b16 %v118
  %v498 = vunpack.c.h.b16 %v118
  %v499 = vunpack.c.l.b16 %v119
  %v500 = vunpack.c.h.b16 %v119
  %v501 = vunpack.c.l.b16 %v120
  %v502 = vunpack.c.h.b16 %v120
  %v503 = vunpack.c.l.b16 %v121
  %v504 = vunpack.c.h.b16 %v121
  %v505 = vunpack.c.l.b16 %v122
  %v506 = vunpack.c.h.b16 %v122
  %v507 = vunpack.c.l.b16 %v123
  %v508 = vunpack.c.h.b16 %v123
  %v509 = vunpack.c.l.b16 %v124
  %v510 = vunpack.c.h.b16 %v124
  %v511 = vunpack.c.l.b16 %v125
  %v512 = vunpack.c.h.b16 %v125
  %v513 = vunpack.c.l.b16 %v126
  %v514 = vunpack.c.h.b16 %v126
  %v515 = vunpack.c.l.b16 %v127
  %v516 = vunpack.c.h.b16 %v127
  %v517 = vunpack.c.l.b16 %v128
  %v518 = vunpack.c.h.b16 %v128
  %v519 = vunpack.c.l.b16 %v129
  %v520 = vunpack.c.h.b16 %v129
  %v521 = vunpack.c.l.b16 %v130
  %v522 = vunpack.c.h.b16 %v130
  %v523 = vunpack.c.l.b16 %v131
  %v524 = vunpack.c.h.b16 %v131
  %v525 = vunpack.c.l.b16 %v132
  %v526 = vunpack.c.h.b16 %v132
  %v527 = vunpack.c.l.b16 %v133
  %v528 = vunpack.c.h.b16 %v133
  %v529 = vunpack.c.l.b16 %v134
  %v530 = vunpack.c.h.b16 %v134
  %v531 = vunpack.c.l.b16 %v135
  %v532 = vunpack.c.h.b16 %v135
  %v533 = vunpack.c.l.b16 %v136
  %v534 = vunpack.c.h.b16 %v136
  %v535 = vunpack.c.l.b16 %v137
  %v536 = vunpack.c.h.b16 %v137
  %v537 = vunpack.c.l.b16 %v138
  %v538 = vunpack.c.h.b16 %v138
  %v539 = vunpack.c.l.b16 %v139
  %v540 = vunpack.c.h.b16 %v139
  %v541 = vunpack.c.l.b16 %v140
  %v542 = vunpack.c.h.b16 %v140
  %v543 = vunpack.c.l.b16 %v141
  %v544 = vunpack.c.h.b16 %v141
  %v545 = vunpack.c.l.b16 %v142
  %v546 = vunpack.c.h.b16 %v142
  %v547 = vunpack.c.l.b16 %v143
  %v548 = vunpack.c.h.b16 %v143
  %v549 = vunpack.c.l.b16 %v144
  %v550 = vunpack.c.h.b16 %v144
  %v551 = vunpack.c.l.b16 %v145
  %v552 = vunpack.c.h.b16 %v145
  %v553 = vunpack.c.l.b16 %v146
  %v554 = vunpack.c.h.b16 %v146
  %v555 = vunpack.c.l.b16 %v147
  %v556 = vunpack.c.h.b16 %v147
  %v557 = vunpack.c.l.b16 %v148
  %v558 = vunpack.c.h.b16 %v148
  %v559 = vunpack.c.l.b16 %v149
  %v560 = vunpack.c.h.b16 %v149
  %v561 = vunpack.c.l.b16 %v150
  %v562 = vunpack.c.h.b16 %v150
  %v563 = vunpack.c.l.b16 %v151
  %v564 = vunpack.c.h.b16 %v151
  %v565 = vunpack.c.l.b16 %v152
  %v566 = vunpack.c.h.b16 %v152
  %v567 = vunpack.c.l.b16 %v153
  %v568 = vunpack.c.h.b16 %v153
  %v569 = vunpack.c.l.b16 %v154
  %v570 = vunpack.c.h.b16 %v154
  %v571 = vunpack.c.l.b16 %v155
  %v572 = vunpack.c.h.b16 %v155
  %v573 = vpack.c.b16 %v349, %v347
  %v574 = vpack.c.b16 %v350, %v348
  %v575 = vpack.c.b16 %v353, %v351
  %v576 = vpack.c.b16 %v354, %v352
  %v577 = vpack.c.b16 %v357, %v355
  %v578 = vpack.c.b16 %v358, %v356
  %v579 = vpack.c.b16 %v361, %v359
  %v580 = vpack.c.b16 %v362, %v360
  %v581 = vpack.c.b16 %v365, %v363
  %v582 = vpack.c.b16 %v366, %v364
  %v583 = vpack.c.b16 %v369, %v367
  %v584 = vpack.c.b16 %v370, %v368
  %v585 = vpack.c.b16 %v373, %v371
  %v586 = vpack.c.b16 %v374, %v372
  %v587 = vpack.c.b16 %v377, %v375
  %v588 = vpack.c.b16 %v378, %v376
  %v589 = vpack.c.b16 %v381, %v379
  %v590 = vpack.c.b16 %v382, %v380
  %v591 = vpack.c.b16 %v385, %v383
  %v592 = vpack.c.b16 %v386, %v384
  %v593 = vpack.c.b16 %v389, %v387
  %v594 = vpack.c.b16 %v390, %v388
  %v595 = vpack.c.b16 %v393, %v391
  %v596 = vpack.c.b16 %v394, %v392
  %v597 = vpack.c.b16 %v397, %v395
  %v598 = vpack.c.b16 %v398, %v396
  %v599 = vpack.c.b16 %v401, %v399
  %v600 = vpack.c.b16 %v402, %v400
  %v601 = vpack.c.b16 %v405, %v403
  %v602 = vpack.c.b16 %v406, %v404
  %v603 = vpack.c.b16 %v409, %v407
  %v604 = vpack.c.b16 %v410, %v408
  %v605 = vpack.c.b16 %v413, %v411
  %v606 = vpack.c.b16 %v414, %v412
  %v607 = vpack.c.b16 %v417, %v415
  %v608 = vpack.c.b16 %v418, %v416
  %v609 = vpack.c.b16 %v421, %v419
  %v610 = vpack.c.b16 %v422, %v420
  %v611 = vpack.c.b16 %v425, %v423
  %v612 = vpack.c.b16 %v426, %v424
  %v613 = vpack.c.b16 %v429, %v427
  %v614 = vpack.c.b16 %v430, %v428
  %v615 = vpack.c.b16 %v433, %v431
  %v616 = vpack.c.b16 %v434, %v432
  %v617 = vpack.c.b16 %v437, %v435
  %v618 = vpack.c.b16 %v438, %v436
  %v619 = vpack.c.b16 %v441, %v439
  %v620 = vpack.c.b16 %v442, %v440
  %v621 = vpack.c.b16 %v445, %v443
  %v622 = vpack.c.b16 %v446, %v444
  %v623 = vpack.c.b16 %v449, %v447
  %v624 = vpack.c.b16 %v450, %v448
  %v625 = vpack.c.b16 %v453, %v451
  %v626 = vpack.c.b16 %v454, %v452
  %v627 = vpack.c.b16 %v457, %v455
  %v628 = vpack.c.b16 %v458, %v456
  %v629 = vpack.c.b16 %v461, %v459
  %v630 = vpack.c.b16 %v462, %v460
  %v631 = vpack.c.b16 %v465, %v463
  %v632 = vpack.c.b16 %v466, %v464
  %v633 = vpack.c.b16 %v469, %v467
  %v634 = vpack.c.b16 %v470, %v468
  %v635 = vpack.c.b16 %v473, %v471
  %v636 = vpack.c.b16 %v474, %v472
  %v637 = vpack.c.b16 %v477, %v475
  %v638 = vpack.c.b16 %v478, %v476
  %v639 = vpack.c.b16 %v481, %v479
  %v640 = vpack.c.b16 %v482, %v480
  %v641 = vpack.c.b16 %v485, %v483
  %v642 = vpack.c.b16 %v486, %v484
  %v643 = vpack.c.b16 %v489, %v487
  %v644 = vpack.c.b16 %v490, %v488
  %v645 = vpack.c.b16 %v493, %v491
  %v646 = vpack.c.b16 %v494, %v492
  %v647 = vpack.c.b16 %v497, %v495
  %v648 = vpack.c.b16 %v498, %v496
  %v649 = vpack.c.b16 %v501, %v499
  %v650 = vpack.c.b16 %v502, %v500
  %v651 = vpack.c.b16 %v505, %v503
  %v652 = vpack.c.b16 %v506, %v504
  %v653 = vpack.c.b16 %v509, %v507
  %v654 = vpack.c.b16 %v510, %v508
  %v655 = vpack.c.b16 %v513, %v511
  %v656 = vpack.c.b16 %v514, %v512
  %v657 = vpack.c.b16 %v517, %v515
  %v658 = vpack.c.b16 %v518, %v516
  %v659 = vpack.c.b16 %v521, %v519
  %v660 = vpack.c.b16 %v522, %v520
  %v661 = vpack.c.b16 %v525, %v523
  %v662 = vpack.c.b16 %v526, %v524
  %v663 = vpack.c.b16 %v529, %v527
  %v664 = vpack.c.b16 %v530, %v528
  %v665 = vpack.c.b16 %v533, %v531
  %v666 = vpack.c.b16 %v534, %v532
  %v667 = vpack.c.b16 %v537, %v535
  %v668 = vpack.c.b16 %v538, %v536
  %v669 = vpack.c.b16 %v541, %v539
  %v670 = vpack.c.b16 %v542, %v540
  %v671 = vpack.c.b16 %v545, %v543
  %v672 = vpack.c.b16 %v546, %v544
  %v673 = vpack.c.b16 %v549, %v547
  %v674 = vpack.c.b16 %v550, %v548
  %v675 = vpack.c.b16 %v553, %v551
  %v676 = vpack.c.b16 %v554, %v552
  %v677 = vpack.c.b16 %v557, %v555
  %v678 = vpack.c.b16 %v558, %v556
  %v679 = vpack.c.b16 %v561, %v559
  %v680 = vpack.c.b16 %v562, %v560
  %v681 = vpack.c.b16 %v565, %v563
  %v682 = vpack.c.b16 %v566, %v564
  %v683 = vpack.c.b16 %v569, %v567
  %v684 = vpack.c.b16 %v570, %v568
  %v685 = vpack.c.b16 %v571, %v571
  %v686 = vpack.c.b16 %v572, %v572
  %vm799 = vcmask 31744
  %v801 = vsel %vm799, %v211, 0
  %v804 = vsel %vm799, %v219, 0
  %vm806 = vcmask 1041408
  %v808 = vsel %vm806, %v685, 0
  %v811 = vsel %vm806, %v686, 0
  %813 = vmatprep.subr.bf16.mxu0 %v574
  %814 = vmatpush1.bf16.msra.mxu0 %v573
  %815 = vmatprep.subr.bf16.mxu0 %v576
  %816 = vmatpush1.bf16.msra.mxu0 %v575
  %817 = vmatprep.subr.bf16.mxu0 %v578
  %818 = vmatpush1.bf16.msra.mxu0 %v577
  %819 = vmatprep.subr.bf16.mxu0 %v580
  %820 = vmatpush1.bf16.msra.mxu0 %v579
  %821 = vmatprep.subr.bf16.mxu0 %v582
  %822 = vmatpush1.bf16.msra.mxu0 %v581
  %823 = vmatprep.subr.bf16.mxu0 %v584
  %824 = vmatpush1.bf16.msra.mxu0 %v583
  %825 = vmatprep.subr.bf16.mxu0 %v586
  %826 = vmatpush1.bf16.msra.mxu0 %v585
  %827 = vmatprep.subr.bf16.mxu0 %v588
  %828 = vmatpush1.bf16.msra.mxu0 %v587
  %829 = vmatprep.subr.bf16.mxu0 %v590
  %830 = vmatpush1.bf16.msra.mxu0 %v589
  %831 = vmatprep.subr.bf16.mxu0 %v592
  %832 = vmatpush1.bf16.msra.mxu0 %v591
  %833 = vmatprep.subr.bf16.mxu0 %v594
  %834 = vmatpush1.bf16.msra.mxu0 %v593
  %835 = vmatprep.subr.bf16.mxu0 %v596
  %836 = vmatpush1.bf16.msra.mxu0 %v595
  %837 = vmatprep.subr.bf16.mxu0 %v598
  %838 = vmatpush1.bf16.msra.mxu0 %v597
  %839 = vmatprep.subr.bf16.mxu0 %v600
  %840 = vmatpush1.bf16.msra.mxu0 %v599
  %841 = vmatprep.subr.bf16.mxu0 %v602
  %842 = vmatpush1.bf16.msra.mxu0 %v601
  %843 = vmatprep.subr.bf16.mxu0 %v604
  %844 = vmatpush1.bf16.msra.mxu0 %v603
  %845 = vmatprep.mubr.bf16.mxu0 %v205
  %846 = vmatmul.mubr.bf16.gmra.mrb[0].mxu0 %v204
  %v847 = vpop.f32.mrb[0].mxu0
  %v848 = vadd.f32 0.0, %v847
  %v849 = vpop.f32.mrb[0].mxu0
  %v850 = vadd.f32 0.0, %v849
  %v851 = vpop.f32.mrb[0].mxu0
  %v852 = vadd.f32 0.0, %v851
  %v853 = vpop.f32.mrb[0].mxu0
  %v854 = vadd.f32 0.0, %v853
  %855 = vmatprep.mubr.bf16.mxu0 %v213
  %856 = vmatmul.mubr.bf16.gmra.mrb[0].mxu0 %v212
  %v857 = vpop.f32.mrb[0].mxu0
  %v858 = vadd.f32 0.0, %v857
  %v859 = vpop.f32.mrb[0].mxu0
  %v860 = vadd.f32 0.0, %v859
  %v861 = vpop.f32.mrb[0].mxu0
  %v862 = vadd.f32 0.0, %v861
  %v863 = vpop.f32.mrb[0].mxu0
  %v864 = vadd.f32 0.0, %v863
  %865 = vdwg.mxu0
  %866 = vmatprep.subr.bf16.mxu0 %v606
  %867 = vmatpush1.bf16.msra.mxu0 %v605
  %868 = vmatprep.subr.bf16.mxu0 %v608
  %869 = vmatpush1.bf16.msra.mxu0 %v607
  %870 = vmatprep.subr.bf16.mxu0 %v610
  %871 = vmatpush1.bf16.msra.mxu0 %v609
  %872 = vmatprep.subr.bf16.mxu0 %v612
  %873 = vmatpush1.bf16.msra.mxu0 %v611
  %874 = vmatprep.subr.bf16.mxu0 %v614
  %875 = vmatpush1.bf16.msra.mxu0 %v613
  %876 = vmatprep.subr.bf16.mxu0 %v616
  %877 = vmatpush1.bf16.msra.mxu0 %v615
  %878 = vmatprep.subr.bf16.mxu0 %v618
  %879 = vmatpush1.bf16.msra.mxu0 %v617
  %880 = vmatprep.subr.bf16.mxu0 %v620
  %881 = vmatpush1.bf16.msra.mxu0 %v619
  %882 = vmatprep.subr.bf16.mxu0 %v622
  %883 = vmatpush1.bf16.msra.mxu0 %v621
  %884 = vmatprep.subr.bf16.mxu0 %v624
  %885 = vmatpush1.bf16.msra.mxu0 %v623
  %886 = vmatprep.subr.bf16.mxu0 %v626
  %887 = vmatpush1.bf16.msra.mxu0 %v625
  %888 = vmatprep.subr.bf16.mxu0 %v628
  %889 = vmatpush1.bf16.msra.mxu0 %v627
  %890 = vmatprep.subr.bf16.mxu0 %v630
  %891 = vmatpush1.bf16.msra.mxu0 %v629
  %892 = vmatprep.subr.bf16.mxu0 %v632
  %893 = vmatpush1.bf16.msra.mxu0 %v631
  %894 = vmatprep.subr.bf16.mxu0 %v634
  %895 = vmatpush1.bf16.msra.mxu0 %v633
  %896 = vmatprep.subr.bf16.mxu0 %v636
  %897 = vmatpush1.bf16.msra.mxu0 %v635
  %898 = vmatprep.mubr.bf16.mxu0 %v207
  %899 = vmatmul.mubr.bf16.gmra.mrb[0].mxu0 %v206
  %v900 = vpop.f32.mrb[0].mxu0
  %v901 = vadd.f32 %v848, %v900
  %v902 = vpop.f32.mrb[0].mxu0
  %v903 = vadd.f32 %v850, %v902
  %v904 = vpop.f32.mrb[0].mxu0
  %v905 = vadd.f32 %v852, %v904
  %v906 = vpop.f32.mrb[0].mxu0
  %v907 = vadd.f32 %v854, %v906
  %908 = vmatprep.mubr.bf16.mxu0 %v215
  %909 = vmatmul.mubr.bf16.gmra.mrb[0].mxu0 %v214
  %v910 = vpop.f32.mrb[0].mxu0
  %v911 = vadd.f32 %v858, %v910
  %v912 = vpop.f32.mrb[0].mxu0
  %v913 = vadd.f32 %v860, %v912
  %v914 = vpop.f32.mrb[0].mxu0
  %v915 = vadd.f32 %v862, %v914
  %v916 = vpop.f32.mrb[0].mxu0
  %v917 = vadd.f32 %v864, %v916
  %918 = vdwg.mxu0
  %919 = vmatprep.subr.bf16.mxu0 %v638
  %920 = vmatpush1.bf16.msra.mxu0 %v637
  %921 = vmatprep.subr.bf16.mxu0 %v640
  %922 = vmatpush1.bf16.msra.mxu0 %v639
  %923 = vmatprep.subr.bf16.mxu0 %v642
  %924 = vmatpush1.bf16.msra.mxu0 %v641
  %925 = vmatprep.subr.bf16.mxu0 %v644
  %926 = vmatpush1.bf16.msra.mxu0 %v643
  %927 = vmatprep.subr.bf16.mxu0 %v646
  %928 = vmatpush1.bf16.msra.mxu0 %v645
  %929 = vmatprep.subr.bf16.mxu0 %v648
  %930 = vmatpush1.bf16.msra.mxu0 %v647
  %931 = vmatprep.subr.bf16.mxu0 %v650
  %932 = vmatpush1.bf16.msra.mxu0 %v649
  %933 = vmatprep.subr.bf16.mxu0 %v652
  %934 = vmatpush1.bf16.msra.mxu0 %v651
  %935 = vmatprep.subr.bf16.mxu0 %v654
  %936 = vmatpush1.bf16.msra.mxu0 %v653
  %937 = vmatprep.subr.bf16.mxu0 %v656
  %938 = vmatpush1.bf16.msra.mxu0 %v655
  %939 = vmatprep.subr.bf16.mxu0 %v658
  %940 = vmatpush1.bf16.msra.mxu0 %v657
  %941 = vmatprep.subr.bf16.mxu0 %v660
  %942 = vmatpush1.bf16.msra.mxu0 %v659
  %943 = vmatprep.subr.bf16.mxu0 %v662
  %944 = vmatpush1.bf16.msra.mxu0 %v661
  %945 = vmatprep.subr.bf16.mxu0 %v664
  %946 = vmatpush1.bf16.msra.mxu0 %v663
  %947 = vmatprep.subr.bf16.mxu0 %v666
  %948 = vmatpush1.bf16.msra.mxu0 %v665
  %949 = vmatprep.subr.bf16.mxu0 %v668
  %950 = vmatpush1.bf16.msra.mxu0 %v667
  %951 = vmatprep.mubr.bf16.mxu0 %v209
  %952 = vmatmul.mubr.bf16.gmra.mrb[0].mxu0 %v208
  %v953 = vpop.f32.mrb[0].mxu0
  %v954 = vadd.f32 %v901, %v953
  %v955 = vpop.f32.mrb[0].mxu0
  %v956 = vadd.f32 %v903, %v955
  %v957 = vpop.f32.mrb[0].mxu0
  %v958 = vadd.f32 %v905, %v957
  %v959 = vpop.f32.mrb[0].mxu0
  %v960 = vadd.f32 %v907, %v959
  %961 = vmatprep.mubr.bf16.mxu0 %v217
  %962 = vmatmul.mubr.bf16.gmra.mrb[0].mxu0 %v216
  %v963 = vpop.f32.mrb[0].mxu0
  %v964 = vadd.f32 %v911, %v963
  %v965 = vpop.f32.mrb[0].mxu0
  %v966 = vadd.f32 %v913, %v965
  %v967 = vpop.f32.mrb[0].mxu0
  %v968 = vadd.f32 %v915, %v967
  %v969 = vpop.f32.mrb[0].mxu0
  %v970 = vadd.f32 %v917, %v969
  %971 = vdwg.mxu0
  %972 = vmatprep.subr.bf16.mxu0 %v670
  %973 = vmatpush1.bf16.msra.mxu0 %v669
  %974 = vmatprep.subr.bf16.mxu0 %v672
  %975 = vmatpush1.bf16.msra.mxu0 %v671
  %976 = vmatprep.subr.bf16.mxu0 %v674
  %977 = vmatpush1.bf16.msra.mxu0 %v673
  %978 = vmatprep.subr.bf16.mxu0 %v676
  %979 = vmatpush1.bf16.msra.mxu0 %v675
  %980 = vmatprep.subr.bf16.mxu0 %v678
  %981 = vmatpush1.bf16.msra.mxu0 %v677
  %982 = vmatprep.subr.bf16.mxu0 %v680
  %983 = vmatpush1.bf16.msra.mxu0 %v679
  %984 = vmatprep.subr.bf16.mxu0 %v682
  %985 = vmatpush1.bf16.msra.mxu0 %v681
  %986 = vmatprep.subr.bf16.mxu0 %v684
  %987 = vmatpush1.bf16.msra.mxu0 %v683
  %988 = vmatprep.subr.bf16.mxu0 %v811
  %989 = vmatpush1.bf16.msra.mxu0 %v808
  %990 = vmatprep.subr.bf16.mxu0 0
  %991 = vmatpush1.bf16.msra.mxu0 0
  %992 = vmatprep.subr.bf16.mxu0 0
  %993 = vmatpush1.bf16.msra.mxu0 0
  %994 = vmatprep.subr.bf16.mxu0 0
  %995 = vmatpush1.bf16.msra.mxu0 0
  %996 = vmatprep.subr.bf16.mxu0 0
  %997 = vmatpush1.bf16.msra.mxu0 0
  %998 = vmatprep.subr.bf16.mxu0 0
  %999 = vmatpush1.bf16.msra.mxu0 0
  %1000 = vmatprep.subr.bf16.mxu0 0
  %1001 = vmatpush1.bf16.msra.mxu0 0
  %1002 = vmatprep.subr.bf16.mxu0 0
  %1003 = vmatpush1.bf16.msra.mxu0 0
  %1004 = vmatprep.mubr.bf16.mxu0 %v801
  %1005 = vmatmul.mubr.bf16.gmra.mrb[0].mxu0 %v210
  %v1006 = vpop.f32.mrb[0].mxu0
  %v1007 = vadd.f32 %v954, %v1006
  %v1008 = vpop.f32.mrb[0].mxu0
  %v1009 = vadd.f32 %v956, %v1008
  %v1010 = vpop.f32.mrb[0].mxu0
  %v1011 = vadd.f32 %v958, %v1010
  %v1012 = vpop.f32.mrb[0].mxu0
  %v1013 = vadd.f32 %v960, %v1012
  %1014 = vmatprep.mubr.bf16.mxu0 %v804
  %1015 = vmatmul.mubr.bf16.gmra.mrb[0].mxu0 %v218
  %v1016 = vpop.f32.mrb[0].mxu0
  %v1017 = vadd.f32 %v964, %v1016
  %v1018 = vpop.f32.mrb[0].mxu0
  %v1019 = vadd.f32 %v966, %v1018
  %v1020 = vpop.f32.mrb[0].mxu0
  %v1021 = vadd.f32 %v968, %v1020
  %v1022 = vpop.f32.mrb[0].mxu0
  %v1023 = vadd.f32 %v970, %v1022
  %1024 = vdwg.mxu0
  %v1025 = vmax.f32 %v1007, %v1011
  %v1026 = vmax.f32 %v1009, %v1013
  %v1027 = vmax.f32 %v1025, %v1017
  %v1028 = vmax.f32 %v1026, %v1019
  %v1029 = vmax.f32 %v1027, %v1021
  %v1030 = vmax.f32 %v1028, %v1023
  %v1031 = vld [vmem:[%s2] sm:$0x3]
  %v1033 = vlaneseq
  %v1034 = vshrl.u32 %v1033, 7
  %v1035 = vsub.s32 0, %v1034
  %v1036 = vrot.slane %v1031, %v1035
  %v1037 = vlaneseq
  %v1038 = vshrl.u32 %v1037, 7
  %v1039 = vsub.s32 1, %v1038
  %v1040 = vrot.slane %v1031, %v1039
  %v1043 = vadd.f32 %v1029, %v1036
  %v1044 = vadd.f32 %v1030, %v1040
  %v1045 = vmax.f32 %v1043, 0.0
  %v1046 = vmax.f32 %v1044, 0.0
  %v1047 = vpack.c.bf16 %v1045, %v1045
  %v1048 = vpack.c.bf16 %v1046, %v1046
  %v1049 = vld [vmem:[%s3] sm:$0xf]
  %v1050 = vld [vmem:[%s3 + $0x4] sm:$0xf]
  %v1051 = vld [vmem:[%s3 + $0x8] sm:$0xf]
  %v1052 = vld [vmem:[%s3 + $0xc] sm:$0xf]
  %v1053 = vld [vmem:[%s3 + $0x10] sm:$0xf]
  %v1054 = vld [vmem:[%s3 + $0x14] sm:$0xf]
  %v1055 = vld [vmem:[%s3 + $0x18] sm:$0xf]
  %v1056 = vld [vmem:[%s3 + $0x1c] sm:$0xf]
  %v1057 = vld [vmem:[%s3 + $0x20] sm:$0xf]
  %v1058 = vld [vmem:[%s3 + $0x24] sm:$0xf]
  %v1059 = vld [vmem:[%s3 + $0x28] sm:$0xf]
  %v1060 = vld [vmem:[%s3 + $0x2c] sm:$0xf]
  %v1061 = vld [vmem:[%s3 + $0x30] sm:$0xf]
  %v1062 = vld [vmem:[%s3 + $0x34] sm:$0xf]
  %v1063 = vld [vmem:[%s3 + $0x38] sm:$0xf]
  %v1064 = vld [vmem:[%s3 + $0x3c] sm:$0xf]
  %v1065 = vld [vmem:[%s3 + $0x40] sm:$0xf]
  %v1066 = vld [vmem:[%s3 + $0x44] sm:$0xf]
  %v1067 = vld [vmem:[%s3 + $0x48] sm:$0xf]
  %v1068 = vld [vmem:[%s3 + $0x4c] sm:$0xf]
  %v1069 = vld [vmem:[%s3 + $0x50] sm:$0xf]
  %v1070 = vld [vmem:[%s3 + $0x54] sm:$0xf]
  %v1071 = vld [vmem:[%s3 + $0x58] sm:$0x3]
  %v1072 = vld [vmem:[%s4] sm:$0x1]
  %v1074 = vlaneseq
  %v1075 = vshrl.u32 %v1074, 7
  %v1076 = vsub.s32 0, %v1075
  %v1077 = vrot.slane %v1072, %v1076
  %v1102 = vunpack.c.l.b16 %v1049
  %v1103 = vunpack.c.l.b16 %v1050
  %v1104 = vunpack.c.l.b16 %v1051
  %v1105 = vunpack.c.l.b16 %v1052
  %v1106 = vunpack.c.l.b16 %v1053
  %v1107 = vunpack.c.l.b16 %v1054
  %v1108 = vunpack.c.l.b16 %v1055
  %v1109 = vunpack.c.l.b16 %v1056
  %v1110 = vunpack.c.l.b16 %v1057
  %v1111 = vunpack.c.l.b16 %v1058
  %v1112 = vunpack.c.l.b16 %v1059
  %v1113 = vunpack.c.l.b16 %v1060
  %v1114 = vunpack.c.l.b16 %v1061
  %v1115 = vunpack.c.l.b16 %v1062
  %v1116 = vunpack.c.l.b16 %v1063
  %v1117 = vunpack.c.l.b16 %v1064
  %v1118 = vunpack.c.l.b16 %v1065
  %v1119 = vunpack.c.l.b16 %v1066
  %v1120 = vunpack.c.l.b16 %v1067
  %v1121 = vunpack.c.l.b16 %v1068
  %v1122 = vunpack.c.l.b16 %v1069
  %v1123 = vunpack.c.l.b16 %v1070
  %v1124 = vunpack.c.l.b16 %v1071
  %v1125 = vpack.c.b16 %v1103, %v1102
  %v1126 = vpack.c.b16 %v1105, %v1104
  %v1127 = vpack.c.b16 %v1107, %v1106
  %v1128 = vpack.c.b16 %v1109, %v1108
  %v1129 = vpack.c.b16 %v1111, %v1110
  %v1130 = vpack.c.b16 %v1113, %v1112
  %v1131 = vpack.c.b16 %v1115, %v1114
  %v1132 = vpack.c.b16 %v1117, %v1116
  %v1133 = vpack.c.b16 %v1119, %v1118
  %v1134 = vpack.c.b16 %v1121, %v1120
  %v1135 = vpack.c.b16 %v1123, %v1122
  %v1136 = vpack.c.b16 %v1124, %v1124
  %vm1148 = vcmask 424960
  %v1150 = vsel %vm1148, %v1048, 0
  %v1153 = vsel %vm806, %v1136, 0
  %1155 = vmatprep.subr.bf16.mxu0 0
  %1156 = vmatpush1.bf16.msra.mxu0 %v1125
  %1157 = vmatprep.subr.bf16.mxu0 0
  %1158 = vmatpush1.bf16.msra.mxu0 %v1126
  %1159 = vmatprep.subr.bf16.mxu0 0
  %1160 = vmatpush1.bf16.msra.mxu0 %v1127
  %1161 = vmatprep.subr.bf16.mxu0 0
  %1162 = vmatpush1.bf16.msra.mxu0 %v1128
  %1163 = vmatprep.subr.bf16.mxu0 0
  %1164 = vmatpush1.bf16.msra.mxu0 %v1129
  %1165 = vmatprep.subr.bf16.mxu0 0
  %1166 = vmatpush1.bf16.msra.mxu0 %v1130
  %1167 = vmatprep.subr.bf16.mxu0 0
  %1168 = vmatpush1.bf16.msra.mxu0 %v1131
  %1169 = vmatprep.subr.bf16.mxu0 0
  %1170 = vmatpush1.bf16.msra.mxu0 %v1132
  %1171 = vmatprep.subr.bf16.mxu0 0
  %1172 = vmatpush1.bf16.msra.mxu0 %v1133
  %1173 = vmatprep.subr.bf16.mxu0 0
  %1174 = vmatpush1.bf16.msra.mxu0 %v1134
  %1175 = vmatprep.subr.bf16.mxu0 0
  %1176 = vmatpush1.bf16.msra.mxu0 %v1135
  %1177 = vmatprep.subr.bf16.mxu0 0
  %1178 = vmatpush1.bf16.msra.mxu0 %v1153
  %1179 = vmatprep.subr.bf16.mxu0 0
  %1180 = vmatpush1.bf16.msra.mxu0 0
  %1181 = vmatprep.subr.bf16.mxu0 0
  %1182 = vmatpush1.bf16.msra.mxu0 0
  %1183 = vmatprep.subr.bf16.mxu0 0
  %1184 = vmatpush1.bf16.msra.mxu0 0
  %1185 = vmatprep.subr.bf16.mxu0 0
  %1186 = vmatpush1.bf16.msra.mxu0 0
  %1187 = vmatprep.mubr.bf16.mxu0 %v1150
  %1188 = vmatmul.mubr.bf16.gmra.mrb[0].mxu0 %v1047
  %v1189 = vpop.f32.mrb[0].mxu0
  %v1190 = vadd.f32 %v1077, %v1189
  %v1191 = vpop.f32.mrb[0].mxu0
  %v1192 = vpop.f32.mrb[0].mxu0
  %v1193 = vpop.f32.mrb[0].mxu0
  %1194 = vdwg.mxu0
  %v1195 = vmax.f32 %v1190, 0.0
  %v1196 = vpack.c.bf16 %v1195, %v1195
  %v1197 = vld [vmem:[%s5] sm:$0xf]
  %v1198 = vld [vmem:[%s5 + $0x4] sm:$0xf]
  %v1199 = vld [vmem:[%s5 + $0x8] sm:$0xf]
  %v1200 = vld [vmem:[%s5 + $0xc] sm:$0xf]
  %v1201 = vld [vmem:[%s5 + $0x10] sm:$0xf]
  %v1202 = vld [vmem:[%s5 + $0x14] sm:$0xf]
  %v1203 = vld [vmem:[%s5 + $0x18] sm:$0x1]
  %v1204 = vld [vmem:[%s6] sm:$0x1]
  %v1206 = vlaneseq
  %v1207 = vshrl.u32 %v1206, 7
  %v1208 = vsub.s32 0, %v1207
  %v1209 = vrot.slane %v1204, %v1208
  %v1218 = vunpack.c.l.b16 %v1197
  %v1219 = vunpack.c.l.b16 %v1198
  %v1220 = vunpack.c.l.b16 %v1199
  %v1221 = vunpack.c.l.b16 %v1200
  %v1222 = vunpack.c.l.b16 %v1201
  %v1223 = vunpack.c.l.b16 %v1202
  %v1224 = vunpack.c.l.b16 %v1203
  %v1225 = vpack.c.b16 %v1219, %v1218
  %v1226 = vpack.c.b16 %v1221, %v1220
  %v1227 = vpack.c.b16 %v1223, %v1222
  %v1228 = vpack.c.b16 %v1224, %v1224
  %vm1232 = vcmask 408576
  %v1234 = vsel %vm1232, %v1196, 0
  %vm1236 = vcmask 1040384
  %v1238 = vsel %vm1236, %v1228, 0
  %1240 = vmatprep.subr.bf16.mxu0 0
  %1241 = vmatpush1.bf16.msra.mxu0 %v1225
  %1242 = vmatprep.subr.bf16.mxu0 0
  %1243 = vmatpush1.bf16.msra.mxu0 %v1226
  %1244 = vmatprep.subr.bf16.mxu0 0
  %1245 = vmatpush1.bf16.msra.mxu0 %v1227
  %1246 = vmatprep.subr.bf16.mxu0 0
  %1247 = vmatpush1.bf16.msra.mxu0 %v1238
  %1248 = vmatprep.subr.bf16.mxu0 0
  %1249 = vmatpush1.bf16.msra.mxu0 0
  %1250 = vmatprep.subr.bf16.mxu0 0
  %1251 = vmatpush1.bf16.msra.mxu0 0
  %1252 = vmatprep.subr.bf16.mxu0 0
  %1253 = vmatpush1.bf16.msra.mxu0 0
  %1254 = vmatprep.subr.bf16.mxu0 0
  %1255 = vmatpush1.bf16.msra.mxu0 0
  %1256 = vmatprep.subr.bf16.mxu0 0
  %1257 = vmatpush1.bf16.msra.mxu0 0
  %1258 = vmatprep.subr.bf16.mxu0 0
  %1259 = vmatpush1.bf16.msra.mxu0 0
  %1260 = vmatprep.subr.bf16.mxu0 0
  %1261 = vmatpush1.bf16.msra.mxu0 0
  %1262 = vmatprep.subr.bf16.mxu0 0
  %1263 = vmatpush1.bf16.msra.mxu0 0
  %1264 = vmatprep.subr.bf16.mxu0 0
  %1265 = vmatpush1.bf16.msra.mxu0 0
  %1266 = vmatprep.subr.bf16.mxu0 0
  %1267 = vmatpush1.bf16.msra.mxu0 0
  %1268 = vmatprep.subr.bf16.mxu0 0
  %1269 = vmatpush1.bf16.msra.mxu0 0
  %1270 = vmatprep.subr.bf16.mxu0 0
  %1271 = vmatpush1.bf16.msra.mxu0 0
  %1272 = vmatprep.mubr.bf16.mxu0 0
  %1273 = vmatmul.mubr.bf16.gmra.mrb[0].mxu0 %v1234
  %v1274 = vpop.f32.mrb[0].mxu0
  %v1275 = vadd.f32 %v1209, %v1274
  %v1276 = vpop.f32.mrb[0].mxu0
  %v1277 = vpop.f32.mrb[0].mxu0
  %v1278 = vpop.f32.mrb[0].mxu0
  %1279 = vdwg.mxu0
  %1280 = vmax.xlane.f32.xlu0 %v1275
  %v1281 = vpop.xlane.xlu0 %1280
  %v1282 = vsub.f32 %v1275, %v1281
  %v1283 = vmul.f32 %v1282, 1.442695
  %v1284 = vpow.pop %v1283
  %1285 = vadd.xlane.f32.xlu0 %v1284
  %v1286 = vpop.xlane.xlu0 %1285
  %v1287 = vlog2.pop %v1286
  %v1288 = vmul.f32 %v1287, 0.6931472
  %v1289 = vsub.f32 %v1282, %v1288
  %1290 = vst [vmem:[%s7] sm:$0xff] %v1289
  // Predicated region
  $region30: #{net_forward.1} parent=0 // pred_check
    _
  $region31: #{net_forward.1} parent=0 // pred_check_branch
    %1292 = sbr.rel (0) target = $region33
  $region32: #{net_forward.1} parent=0 // pred_region
    _
  $region33: #{net_forward.1} parent=0 // pred_fallthru
    _
  // Predicated region
  $region34: #{net_forward.1} parent=0 // pred_check
    _
  $region35: #{net_forward.1} parent=0 // pred_check_branch
    %1294 = sbr.rel (0) target = $region37
  $region36: #{net_forward.1} parent=0 // pred_region
    _
  $region37: #{net_forward.1} parent=0 // pred_fallthru
    _

</llo_original>
